<compile_context>
chip_gen: v6e
topology: v6e:2x2x1
jax: 0.10.0
libtpu: 0.0.40
codegen_flags: <defaults>
</compile_context>

<pallas_src>
import jax
import jax.numpy as jnp
from jax import lax
from jax.experimental import pallas as pl
from jax.experimental.pallas import tpu as pltpu

# ----------------------------- config (small, consistent with the module) ---
BATCH = 2
SEQ = 8
VOCAB = 256
EMB_DIM = 128          # lane-dense last dim (multiple of 128)
PAD_ID = 0
EPS = 1e-5             # torch.nn.LayerNorm default eps


# ----------------------------- Pallas kernel --------------------------------
def emb_lnorm_kernel(ids_ref, table_ref, gb_ref, out_ref, emb_ref):
    """Fused embedding row-gather + LayerNorm.

    ids_ref   : SMEM (N,)   int32   token ids (N = B*S)
    table_ref : VMEM (V, D) f32     embedding table (pad row pre-zeroed)
    gb_ref    : VMEM (2, D) f32     row 0 = gamma, row 1 = beta
    out_ref   : VMEM (N, D) f32
    emb_ref   : VMEM (N, D) f32     scratch for gathered rows
    """
    n_tok = out_ref.shape[0]

    # Direct gather: N tiny -> unrolled loop of dynamic sublane row loads,
    # exact by construction (no MXU, no one-hot build on the VPU).
    def gather(n, carry):
        tok = ids_ref[n]                                   # SMEM scalar read
        emb_ref[pl.ds(n, 1), :] = table_ref[pl.ds(tok, 1), :]
        return carry

    lax.fori_loop(0, n_tok, gather, 0, unroll=True)

    emb = emb_ref[...]                                     # [N, D] f32

    # Two independent reductions off `emb` (shorter dependency chain than
    # mean -> subtract -> second reduction).  Cancellation is negligible at
    # these magnitudes; verified against the reference below.
    mean = jnp.mean(emb, axis=-1, keepdims=True)
    msq = jnp.mean(emb * emb, axis=-1, keepdims=True)
    var = msq - mean * mean
    inv = lax.rsqrt(var + EPS)                             # EUP op

    gamma = gb_ref[0:1, :]                                 # static ref views
    beta = gb_ref[1:2, :]
    out_ref[...] = ((emb - mean) * inv * gamma + beta).astype(out_ref.dtype)


# ----------------------------- wrapper ---------------------------------------
def embedding_lnorm(ids, table, gamma, beta):
    """ids: [B, S] int -> [B, S, D] f32  (== nn.Embedding + nn.LayerNorm)."""
    B, S = ids.shape
    V, D = table.shape
    N = B * S

    ids_flat = ids.reshape(N).astype(jnp.int32)            # 1-D -> tiny SMEM footprint
    gb = jnp.concatenate([gamma.reshape(1, D), beta.reshape(1, D)], axis=0)

    out = pl.pallas_call(
        emb_lnorm_kernel,
        out_shape=jax.ShapeDtypeStruct((N, D), jnp.float32),
        # No grid: single invocation, everything resident, no pipeline buffers.
        in_specs=[
            pl.BlockSpec(memory_space=pltpu.MemorySpace.SMEM),   # ids (N,)
            pl.BlockSpec(memory_space=pltpu.MemorySpace.VMEM),   # table (V, D)
            pl.BlockSpec(memory_space=pltpu.MemorySpace.VMEM),   # gamma/beta (2, D)
        ],
        out_specs=pl.BlockSpec(memory_space=pltpu.MemorySpace.VMEM),
        scratch_shapes=[pltpu.VMEM((N, D), jnp.float32)],
    )(ids_flat, table, gb)
    return out.reshape(B, S, D)


# ----------------------------- main ------------------------------------------
if __name__ == "__main__":
    key = jax.random.PRNGKey(0)
    k_ids, k_tab, k_g, k_b = jax.random.split(key, 4)

    ids = jax.random.randint(k_ids, (BATCH, SEQ), 0, VOCAB, dtype=jnp.int32)
    table = 0.02 * jax.random.normal(k_tab, (VOCAB, EMB_DIM), dtype=jnp.float32)
    table = table.at[PAD_ID].set(0.0)   # padding_idx row zeroed, same as module init
    gamma = 1.0 + 0.1 * jax.random.normal(k_g, (EMB_DIM,), dtype=jnp.float32)
    beta = 0.1 * jax.random.normal(k_b, (EMB_DIM,), dtype=jnp.float32)

    out = embedding_lnorm(ids, table, gamma, beta)
    out = jax.block_until_ready(out)

    # Pure-JAX reference: nn.Embedding lookup + nn.LayerNorm.
    emb_ref = table[ids]
    mean = emb_ref.mean(-1, keepdims=True)
    var = ((emb_ref - mean) ** 2).mean(-1, keepdims=True)
    ref = (emb_ref - mean) / jnp.sqrt(var + EPS) * gamma + beta

    assert out.shape == (BATCH, SEQ, EMB_DIM), out.shape
    assert bool(jnp.all(jnp.isfinite(out)))
    assert bool(jnp.allclose(out, ref, atol=1e-5, rtol=1e-5))
    print("KERNEL_OK")
</pallas_src>

<mosaic_0001>
module attributes {stable_mosaic.version = 11 : i64} {
  func.func @emb_lnorm_kernel(%arg0: memref<16xi32, #tpu.memory_space<smem>>, %arg1: memref<256x128xf32, #tpu.memory_space<vmem>>, %arg2: memref<2x128xf32, #tpu.memory_space<vmem>>, %arg3: memref<16x128xf32, #tpu.memory_space<vmem>>, %arg4: memref<16x128xf32, #tpu.memory_space<vmem>>) attributes {dimension_semantics = [], scalar_prefetch = 0 : i64, scratch_operands = 1 : i64, tpu.core_type = #tpu.core_type<tc>} {
    %c0_i32 = arith.constant 0 : i32
    %0 = arith.index_cast %c0_i32 : i32 to index
    %1 = memref.load %arg0[%0] : memref<16xi32, #tpu.memory_space<smem>>
    %2 = arith.index_cast %1 : i32 to index
    %c0 = arith.constant 0 : index
    %3 = vector.load %arg1[%2, %c0] : memref<256x128xf32, #tpu.memory_space<vmem>>, vector<1x128xf32>
    %4 = arith.index_cast %c0_i32 : i32 to index
    %c0_0 = arith.constant 0 : index
    %5 = vector.load %arg4[%4, %c0_0] : memref<16x128xf32, #tpu.memory_space<vmem>>, vector<1x128xf32>
    tpu.vector_store %arg4[%4, %c0_0], %3 {strides = array<i32>} : memref<16x128xf32, #tpu.memory_space<vmem>>, vector<1x128xf32>,
    %c1_i32 = arith.constant 1 : i32
    %6 = arith.index_cast %c1_i32 : i32 to index
    %7 = memref.load %arg0[%6] : memref<16xi32, #tpu.memory_space<smem>>
    %8 = arith.index_cast %7 : i32 to index
    %c0_1 = arith.constant 0 : index
    %9 = vector.load %arg1[%8, %c0_1] : memref<256x128xf32, #tpu.memory_space<vmem>>, vector<1x128xf32>
    %10 = arith.index_cast %c1_i32 : i32 to index
    %c0_2 = arith.constant 0 : index
    %11 = vector.load %arg4[%10, %c0_2] : memref<16x128xf32, #tpu.memory_space<vmem>>, vector<1x128xf32>
    tpu.vector_store %arg4[%10, %c0_2], %9 {strides = array<i32>} : memref<16x128xf32, #tpu.memory_space<vmem>>, vector<1x128xf32>,
    %c2_i32 = arith.constant 2 : i32
    %12 = arith.index_cast %c2_i32 : i32 to index
    %13 = memref.load %arg0[%12] : memref<16xi32, #tpu.memory_space<smem>>
    %14 = arith.index_cast %13 : i32 to index
    %c0_3 = arith.constant 0 : index
    %15 = vector.load %arg1[%14, %c0_3] : memref<256x128xf32, #tpu.memory_space<vmem>>, vector<1x128xf32>
    %16 = arith.index_cast %c2_i32 : i32 to index
    %c0_4 = arith.constant 0 : index
    %17 = vector.load %arg4[%16, %c0_4] : memref<16x128xf32, #tpu.memory_space<vmem>>, vector<1x128xf32>
    tpu.vector_store %arg4[%16, %c0_4], %15 {strides = array<i32>} : memref<16x128xf32, #tpu.memory_space<vmem>>, vector<1x128xf32>,
    %c3_i32 = arith.constant 3 : i32
    %18 = arith.index_cast %c3_i32 : i32 to index
    %19 = memref.load %arg0[%18] : memref<16xi32, #tpu.memory_space<smem>>
    %20 = arith.index_cast %19 : i32 to index
    %c0_5 = arith.constant 0 : index
    %21 = vector.load %arg1[%20, %c0_5] : memref<256x128xf32, #tpu.memory_space<vmem>>, vector<1x128xf32>
    %22 = arith.index_cast %c3_i32 : i32 to index
    %c0_6 = arith.constant 0 : index
    %23 = vector.load %arg4[%22, %c0_6] : memref<16x128xf32, #tpu.memory_space<vmem>>, vector<1x128xf32>
    tpu.vector_store %arg4[%22, %c0_6], %21 {strides = array<i32>} : memref<16x128xf32, #tpu.memory_space<vmem>>, vector<1x128xf32>,
    %c4_i32 = arith.constant 4 : i32
    %24 = arith.index_cast %c4_i32 : i32 to index
    %25 = memref.load %arg0[%24] : memref<16xi32, #tpu.memory_space<smem>>
    %26 = arith.index_cast %25 : i32 to index
    %c0_7 = arith.constant 0 : index
    %27 = vector.load %arg1[%26, %c0_7] : memref<256x128xf32, #tpu.memory_space<vmem>>, vector<1x128xf32>
    %28 = arith.index_cast %c4_i32 : i32 to index
    %c0_8 = arith.constant 0 : index
    %29 = vector.load %arg4[%28, %c0_8] : memref<16x128xf32, #tpu.memory_space<vmem>>, vector<1x128xf32>
    tpu.vector_store %arg4[%28, %c0_8], %27 {strides = array<i32>} : memref<16x128xf32, #tpu.memory_space<vmem>>, vector<1x128xf32>,
    %c5_i32 = arith.constant 5 : i32
    %30 = arith.index_cast %c5_i32 : i32 to index
    %31 = memref.load %arg0[%30] : memref<16xi32, #tpu.memory_space<smem>>
    %32 = arith.index_cast %31 : i32 to index
    %c0_9 = arith.constant 0 : index
    %33 = vector.load %arg1[%32, %c0_9] : memref<256x128xf32, #tpu.memory_space<vmem>>, vector<1x128xf32>
    %34 = arith.index_cast %c5_i32 : i32 to index
    %c0_10 = arith.constant 0 : index
    %35 = vector.load %arg4[%34, %c0_10] : memref<16x128xf32, #tpu.memory_space<vmem>>, vector<1x128xf32>
    tpu.vector_store %arg4[%34, %c0_10], %33 {strides = array<i32>} : memref<16x128xf32, #tpu.memory_space<vmem>>, vector<1x128xf32>,
    %c6_i32 = arith.constant 6 : i32
    %36 = arith.index_cast %c6_i32 : i32 to index
    %37 = memref.load %arg0[%36] : memref<16xi32, #tpu.memory_space<smem>>
    %38 = arith.index_cast %37 : i32 to index
    %c0_11 = arith.constant 0 : index
    %39 = vector.load %arg1[%38, %c0_11] : memref<256x128xf32, #tpu.memory_space<vmem>>, vector<1x128xf32>
    %40 = arith.index_cast %c6_i32 : i32 to index
    %c0_12 = arith.constant 0 : index
    %41 = vector.load %arg4[%40, %c0_12] : memref<16x128xf32, #tpu.memory_space<vmem>>, vector<1x128xf32>
    tpu.vector_store %arg4[%40, %c0_12], %39 {strides = array<i32>} : memref<16x128xf32, #tpu.memory_space<vmem>>, vector<1x128xf32>,
    %c7_i32 = arith.constant 7 : i32
    %42 = arith.index_cast %c7_i32 : i32 to index
    %43 = memref.load %arg0[%42] : memref<16xi32, #tpu.memory_space<smem>>
    %44 = arith.index_cast %43 : i32 to index
    %c0_13 = arith.constant 0 : index
    %45 = vector.load %arg1[%44, %c0_13] : memref<256x128xf32, #tpu.memory_space<vmem>>, vector<1x128xf32>
    %46 = arith.index_cast %c7_i32 : i32 to index
    %c0_14 = arith.constant 0 : index
    %47 = vector.load %arg4[%46, %c0_14] : memref<16x128xf32, #tpu.memory_space<vmem>>, vector<1x128xf32>
    tpu.vector_store %arg4[%46, %c0_14], %45 {strides = array<i32>} : memref<16x128xf32, #tpu.memory_space<vmem>>, vector<1x128xf32>,
    %c8_i32 = arith.constant 8 : i32
    %48 = arith.index_cast %c8_i32 : i32 to index
    %49 = memref.load %arg0[%48] : memref<16xi32, #tpu.memory_space<smem>>
    %50 = arith.index_cast %49 : i32 to index
    %c0_15 = arith.constant 0 : index
    %51 = vector.load %arg1[%50, %c0_15] : memref<256x128xf32, #tpu.memory_space<vmem>>, vector<1x128xf32>
    %52 = arith.index_cast %c8_i32 : i32 to index
    %c0_16 = arith.constant 0 : index
    %53 = vector.load %arg4[%52, %c0_16] : memref<16x128xf32, #tpu.memory_space<vmem>>, vector<1x128xf32>
    tpu.vector_store %arg4[%52, %c0_16], %51 {strides = array<i32>} : memref<16x128xf32, #tpu.memory_space<vmem>>, vector<1x128xf32>,
    %c9_i32 = arith.constant 9 : i32
    %54 = arith.index_cast %c9_i32 : i32 to index
    %55 = memref.load %arg0[%54] : memref<16xi32, #tpu.memory_space<smem>>
    %56 = arith.index_cast %55 : i32 to index
    %c0_17 = arith.constant 0 : index
    %57 = vector.load %arg1[%56, %c0_17] : memref<256x128xf32, #tpu.memory_space<vmem>>, vector<1x128xf32>
    %58 = arith.index_cast %c9_i32 : i32 to index
    %c0_18 = arith.constant 0 : index
    %59 = vector.load %arg4[%58, %c0_18] : memref<16x128xf32, #tpu.memory_space<vmem>>, vector<1x128xf32>
    tpu.vector_store %arg4[%58, %c0_18], %57 {strides = array<i32>} : memref<16x128xf32, #tpu.memory_space<vmem>>, vector<1x128xf32>,
    %c10_i32 = arith.constant 10 : i32
    %60 = arith.index_cast %c10_i32 : i32 to index
    %61 = memref.load %arg0[%60] : memref<16xi32, #tpu.memory_space<smem>>
    %62 = arith.index_cast %61 : i32 to index
    %c0_19 = arith.constant 0 : index
    %63 = vector.load %arg1[%62, %c0_19] : memref<256x128xf32, #tpu.memory_space<vmem>>, vector<1x128xf32>
    %64 = arith.index_cast %c10_i32 : i32 to index
    %c0_20 = arith.constant 0 : index
    %65 = vector.load %arg4[%64, %c0_20] : memref<16x128xf32, #tpu.memory_space<vmem>>, vector<1x128xf32>
    tpu.vector_store %arg4[%64, %c0_20], %63 {strides = array<i32>} : memref<16x128xf32, #tpu.memory_space<vmem>>, vector<1x128xf32>,
    %c11_i32 = arith.constant 11 : i32
    %66 = arith.index_cast %c11_i32 : i32 to index
    %67 = memref.load %arg0[%66] : memref<16xi32, #tpu.memory_space<smem>>
    %68 = arith.index_cast %67 : i32 to index
    %c0_21 = arith.constant 0 : index
    %69 = vector.load %arg1[%68, %c0_21] : memref<256x128xf32, #tpu.memory_space<vmem>>, vector<1x128xf32>
    %70 = arith.index_cast %c11_i32 : i32 to index
    %c0_22 = arith.constant 0 : index
    %71 = vector.load %arg4[%70, %c0_22] : memref<16x128xf32, #tpu.memory_space<vmem>>, vector<1x128xf32>
    tpu.vector_store %arg4[%70, %c0_22], %69 {strides = array<i32>} : memref<16x128xf32, #tpu.memory_space<vmem>>, vector<1x128xf32>,
    %c12_i32 = arith.constant 12 : i32
    %72 = arith.index_cast %c12_i32 : i32 to index
    %73 = memref.load %arg0[%72] : memref<16xi32, #tpu.memory_space<smem>>
    %74 = arith.index_cast %73 : i32 to index
    %c0_23 = arith.constant 0 : index
    %75 = vector.load %arg1[%74, %c0_23] : memref<256x128xf32, #tpu.memory_space<vmem>>, vector<1x128xf32>
    %76 = arith.index_cast %c12_i32 : i32 to index
    %c0_24 = arith.constant 0 : index
    %77 = vector.load %arg4[%76, %c0_24] : memref<16x128xf32, #tpu.memory_space<vmem>>, vector<1x128xf32>
    tpu.vector_store %arg4[%76, %c0_24], %75 {strides = array<i32>} : memref<16x128xf32, #tpu.memory_space<vmem>>, vector<1x128xf32>,
    %c13_i32 = arith.constant 13 : i32
    %78 = arith.index_cast %c13_i32 : i32 to index
    %79 = memref.load %arg0[%78] : memref<16xi32, #tpu.memory_space<smem>>
    %80 = arith.index_cast %79 : i32 to index
    %c0_25 = arith.constant 0 : index
    %81 = vector.load %arg1[%80, %c0_25] : memref<256x128xf32, #tpu.memory_space<vmem>>, vector<1x128xf32>
    %82 = arith.index_cast %c13_i32 : i32 to index
    %c0_26 = arith.constant 0 : index
    %83 = vector.load %arg4[%82, %c0_26] : memref<16x128xf32, #tpu.memory_space<vmem>>, vector<1x128xf32>
    tpu.vector_store %arg4[%82, %c0_26], %81 {strides = array<i32>} : memref<16x128xf32, #tpu.memory_space<vmem>>, vector<1x128xf32>,
    %c14_i32 = arith.constant 14 : i32
    %84 = arith.index_cast %c14_i32 : i32 to index
    %85 = memref.load %arg0[%84] : memref<16xi32, #tpu.memory_space<smem>>
    %86 = arith.index_cast %85 : i32 to index
    %c0_27 = arith.constant 0 : index
    %87 = vector.load %arg1[%86, %c0_27] : memref<256x128xf32, #tpu.memory_space<vmem>>, vector<1x128xf32>
    %88 = arith.index_cast %c14_i32 : i32 to index
    %c0_28 = arith.constant 0 : index
    %89 = vector.load %arg4[%88, %c0_28] : memref<16x128xf32, #tpu.memory_space<vmem>>, vector<1x128xf32>
    tpu.vector_store %arg4[%88, %c0_28], %87 {strides = array<i32>} : memref<16x128xf32, #tpu.memory_space<vmem>>, vector<1x128xf32>,
    %c15_i32 = arith.constant 15 : i32
    %90 = arith.index_cast %c15_i32 : i32 to index
    %91 = memref.load %arg0[%90] : memref<16xi32, #tpu.memory_space<smem>>
    %92 = arith.index_cast %91 : i32 to index
    %c0_29 = arith.constant 0 : index
    %93 = vector.load %arg1[%92, %c0_29] : memref<256x128xf32, #tpu.memory_space<vmem>>, vector<1x128xf32>
    %94 = arith.index_cast %c15_i32 : i32 to index
    %c0_30 = arith.constant 0 : index
    %95 = vector.load %arg4[%94, %c0_30] : memref<16x128xf32, #tpu.memory_space<vmem>>, vector<1x128xf32>
    tpu.vector_store %arg4[%94, %c0_30], %93 {strides = array<i32>} : memref<16x128xf32, #tpu.memory_space<vmem>>, vector<1x128xf32>,
    %c16_i32 = arith.constant 16 : i32
    %c0_31 = arith.constant 0 : index
    %c0_32 = arith.constant 0 : index
    %96 = vector.load %arg4[%c0_31, %c0_32] : memref<16x128xf32, #tpu.memory_space<vmem>>, vector<16x128xf32>
    %cst = arith.constant dense<0.000000e+00> : vector<16xf32>
    %97 = vector.multi_reduction <add>, %96, %cst [1] : vector<16x128xf32> to vector<16xf32>
    %98 = vector.shape_cast %97 : vector<16xf32> to vector<16x1xf32>
    %cst_33 = arith.constant 1.280000e+02 : f32
    %99 = vector.broadcast %cst_33 : f32 to vector<16x1xf32>
    %100 = arith.divf %98, %99 : vector<16x1xf32>
    %101 = arith.mulf %96, %96 : vector<16x128xf32>
    %cst_34 = arith.constant dense<0.000000e+00> : vector<16xf32>
    %102 = vector.multi_reduction <add>, %101, %cst_34 [1] : vector<16x128xf32> to vector<16xf32>
    %103 = vector.shape_cast %102 : vector<16xf32> to vector<16x1xf32>
    %cst_35 = arith.constant 1.280000e+02 : f32
    %104 = vector.broadcast %cst_35 : f32 to vector<16x1xf32>
    %105 = arith.divf %103, %104 : vector<16x1xf32>
    %106 = arith.mulf %100, %100 : vector<16x1xf32>
    %107 = arith.subf %105, %106 : vector<16x1xf32>
    %cst_36 = arith.constant 9.99999974E-6 : f32
    %108 = vector.broadcast %cst_36 : f32 to vector<16x1xf32>
    %109 = arith.addf %107, %108 : vector<16x1xf32>
    %110 = math.rsqrt %109 : vector<16x1xf32>
    %c0_37 = arith.constant 0 : index
    %c0_38 = arith.constant 0 : index
    %111 = vector.load %arg2[%c0_37, %c0_38] : memref<2x128xf32, #tpu.memory_space<vmem>>, vector<1x128xf32>
    %c1 = arith.constant 1 : index
    %c0_39 = arith.constant 0 : index
    %112 = vector.load %arg2[%c1, %c0_39] : memref<2x128xf32, #tpu.memory_space<vmem>>, vector<1x128xf32>
    %113 = vector.broadcast %100 : vector<16x1xf32> to vector<16x128xf32>
    %114 = arith.subf %96, %113 : vector<16x128xf32>
    %115 = vector.broadcast %110 : vector<16x1xf32> to vector<16x128xf32>
    %116 = arith.mulf %114, %115 : vector<16x128xf32>
    %117 = vector.broadcast %111 : vector<1x128xf32> to vector<16x128xf32>
    %118 = arith.mulf %116, %117 : vector<16x128xf32>
    %119 = vector.broadcast %112 : vector<1x128xf32> to vector<16x128xf32>
    %120 = arith.addf %118, %119 : vector<16x128xf32>
    %c0_40 = arith.constant 0 : index
    %c0_41 = arith.constant 0 : index
    %121 = vector.load %arg3[%c0_40, %c0_41] : memref<16x128xf32, #tpu.memory_space<vmem>>, vector<16x128xf32>
    tpu.vector_store %arg3[%c0_40, %c0_41], %120 {strides = array<i32>} : memref<16x128xf32, #tpu.memory_space<vmem>>, vector<16x128xf32>,
    return
  }
}

</mosaic_0001>

<llo_original>
// kernel: tpu_custom_call.1
$region0: #{tpu_custom_call.1}
  #allocation0 [shape = 'u32[]', space=smem, size = 0x4, offset = 0x4, fixed_abs, tag = 'smem constant byte address 0x4 - core index']
  #allocation1 [shape = 'u32[144,128]{1,0:T(1,128)}', space=vmem, size = 0x12000, scoped, tag = 'internal scratch']
  #allocation2 [shape = 'f32[16,128]{1,0:T(8,128)}', space=vmem, size = 0x2000, scoped, tag = 'scratch operand']
  %s0 = inlined_call_operand.hbm [shape: s32[16], index: 0, kind: input, shape index: {}]
  %s1 = inlined_call_operand.hbm [shape: f32[256,128], index: 1, kind: input, shape index: {}]
  %s2 = inlined_call_operand.vmem [shape: f32[2,128], index: 2, kind: input, shape index: {}]
  %s3 = inlined_call_operand.hbm [shape: f32[16,128], index: 3, kind: output, shape index: {}]
  %s4 = sld [smem:[#allocation0]]
  $region30: #{tpu_custom_call.1} parent=0
    _
  %s6 = ssub.s32 1, %s4
  %s7 = scalar_select 0, %s6, %s4
  $region1: #{tpu_custom_call.1} parent=0
    #allocation3 [shape = 'u8[512]{0}', space=smem, size = 0x200, scoped, tag = 'input window, operand 0, single buffered']
    #allocation4 [shape = 's32[1]{0}', space=sflag, size = 0x4, scoped, tag = 'scoped memory for tpu_custom_call.1']
    #allocation5 [shape = 's32[1]{0}', space=sflag, size = 0x4, scoped, tag = 'scoped memory for tpu_custom_call.1']
    #allocation6 [shape = 's32[1]{0}', space=sflag, size = 0x4, scoped, tag = 'scoped memory for tpu_custom_call.1']
    #allocation7 [shape = 'u8[131072]{0}', space=vmem, size = 0x20000, scoped, tag = 'input window, operand 1, single buffered']
    #allocation8 [shape = 'u8[8192]{0}', space=vmem, size = 0x2000, scoped, tag = 'output window, operand 0, single buffered']
    %8 = vsyncpa [#allocation6], 0
    %9 = vsyncpa [#allocation4], 0
    %10 = vsyncpa [#allocation5], 0
    // Predicated region
    $region2: #{tpu_custom_call.1} parent=1 // pred_check
      _
    $region3: #{tpu_custom_call.1} parent=1 // pred_check_branch
      %12 = sbr.rel (0) target = $region5
    $region4: #{tpu_custom_call.1} parent=1 // pred_region
      %s14 = ssub.s32 16, 16
      %15 = vsyncadd [#allocation6], %s14
      %18 = dma.hbm_to_smem %s0, 16, [#allocation3], [#allocation6]
    $region5: #{tpu_custom_call.1} parent=1 // pred_fallthru
      _
    // Predicated region
    $region6: #{tpu_custom_call.1} parent=1 // pred_check
      _
    $region7: #{tpu_custom_call.1} parent=1 // pred_check_branch
      %20 = sbr.rel (0) target = $region9
    $region8: #{tpu_custom_call.1} parent=1 // pred_region
      %s22 = ssub.s32 4096, 4096
      %23 = vsyncadd [#allocation4], %s22
      %s24 = sshll.u32 [#allocation7], 4
      %s25 = int_to_ptr.vmem [resolvable:$true] %s24
      %30 = dma.hbm_to_vmem [thread:$0]  %s1, 4096, %s25, [#allocation4], 128, 128, 8
    $region9: #{tpu_custom_call.1} parent=1 // pred_fallthru
      _
    // Predicated region
    $region10: #{tpu_custom_call.1} parent=1 // pred_check
      _
    $region11: #{tpu_custom_call.1} parent=1 // pred_check_branch
      %32 = sbr.rel (0) target = $region13
    $region12: #{tpu_custom_call.1} parent=1 // pred_region
      _
    $region13: #{tpu_custom_call.1} parent=1 // pred_fallthru
      _
    // Predicated region
    $region14: #{tpu_custom_call.1} parent=1 // pred_check
      _
    $region15: #{tpu_custom_call.1} parent=1 // pred_check_branch
      %34 = sbr.rel (0) target = $region17
    $region16: #{tpu_custom_call.1} parent=1 // pred_region
      %35 = dma.done [#allocation6], 16
    $region17: #{tpu_custom_call.1} parent=1 // pred_fallthru
      _
    // Predicated region
    $region18: #{tpu_custom_call.1} parent=1 // pred_check
      _
    $region19: #{tpu_custom_call.1} parent=1 // pred_check_branch
      %37 = sbr.rel (0) target = $region21
    $region20: #{tpu_custom_call.1} parent=1 // pred_region
      %38 = dma.done [#allocation4], 4096
    $region21: #{tpu_custom_call.1} parent=1 // pred_fallthru
      _
    %39 = sfence
    %s40 = sld [smem:[#allocation3]]
    %s41 = scalar_lea.vmem [#allocation7], %s40
    %v42 = vld [vmem:[%s41] sm:$0x1]
    %43 = vst [vmem:[#allocation2] sm:$0x1] %v42
    %s44 = sld [smem:[#allocation3 + $0x1]]
    %s45 = scalar_lea.vmem [#allocation7], %s44
    %v46 = vld [vmem:[%s45] sm:$0x1]
    %47 = vst [vmem:[#allocation2 + $0x1] sm:$0x1] %v46
    %s48 = sld [smem:[#allocation3 + $0x2]]
    %s49 = scalar_lea.vmem [#allocation7], %s48
    %v50 = vld [vmem:[%s49] sm:$0x1]
    %51 = vst [vmem:[#allocation2 + $0x2] sm:$0x1] %v50
    %s52 = sld [smem:[#allocation3 + $0x3]]
    %s53 = scalar_lea.vmem [#allocation7], %s52
    %v54 = vld [vmem:[%s53] sm:$0x1]
    %55 = vst [vmem:[#allocation2 + $0x3] sm:$0x1] %v54
    %s56 = sld [smem:[#allocation3 + $0x4]]
    %s57 = scalar_lea.vmem [#allocation7], %s56
    %v58 = vld [vmem:[%s57] sm:$0x1]
    %59 = vst [vmem:[#allocation2 + $0x4] sm:$0x1] %v58
    %s60 = sld [smem:[#allocation3 + $0x5]]
    %s61 = scalar_lea.vmem [#allocation7], %s60
    %v62 = vld [vmem:[%s61] sm:$0x1]
    %63 = vst [vmem:[#allocation2 + $0x5] sm:$0x1] %v62
    %s64 = sld [smem:[#allocation3 + $0x6]]
    %s65 = scalar_lea.vmem [#allocation7], %s64
    %v66 = vld [vmem:[%s65] sm:$0x1]
    %67 = vst [vmem:[#allocation2 + $0x6] sm:$0x1] %v66
    %s68 = sld [smem:[#allocation3 + $0x7]]
    %s69 = scalar_lea.vmem [#allocation7], %s68
    %v70 = vld [vmem:[%s69] sm:$0x1]
    %71 = vst [vmem:[#allocation2 + $0x7] sm:$0x1] %v70
    %s72 = sld [smem:[#allocation3 + $0x8]]
    %s73 = scalar_lea.vmem [#allocation7], %s72
    %v74 = vld [vmem:[%s73] sm:$0x1]
    %75 = vst [vmem:[#allocation2 + $0x8] sm:$0x1] %v74
    %s76 = sld [smem:[#allocation3 + $0x9]]
    %s77 = scalar_lea.vmem [#allocation7], %s76
    %v78 = vld [vmem:[%s77] sm:$0x1]
    %79 = vst [vmem:[#allocation2 + $0x9] sm:$0x1] %v78
    %s80 = sld [smem:[#allocation3 + $0xa]]
    %s81 = scalar_lea.vmem [#allocation7], %s80
    %v82 = vld [vmem:[%s81] sm:$0x1]
    %83 = vst [vmem:[#allocation2 + $0xa] sm:$0x1] %v82
    %s84 = sld [smem:[#allocation3 + $0xb]]
    %s85 = scalar_lea.vmem [#allocation7], %s84
    %v86 = vld [vmem:[%s85] sm:$0x1]
    %87 = vst [vmem:[#allocation2 + $0xb] sm:$0x1] %v86
    %s88 = sld [smem:[#allocation3 + $0xc]]
    %s89 = scalar_lea.vmem [#allocation7], %s88
    %v90 = vld [vmem:[%s89] sm:$0x1]
    %91 = vst [vmem:[#allocation2 + $0xc] sm:$0x1] %v90
    %s92 = sld [smem:[#allocation3 + $0xd]]
    %s93 = scalar_lea.vmem [#allocation7], %s92
    %v94 = vld [vmem:[%s93] sm:$0x1]
    %95 = vst [vmem:[#allocation2 + $0xd] sm:$0x1] %v94
    %s96 = sld [smem:[#allocation3 + $0xe]]
    %s97 = scalar_lea.vmem [#allocation7], %s96
    %v98 = vld [vmem:[%s97] sm:$0x1]
    %99 = vst [vmem:[#allocation2 + $0xe] sm:$0x1] %v98
    %s100 = sld [smem:[#allocation3 + $0xf]]
    %s101 = scalar_lea.vmem [#allocation7], %s100
    %v102 = vld [vmem:[%s101] sm:$0x1]
    %103 = vst [vmem:[#allocation2 + $0xf] sm:$0x1] %v102
    %v104 = vld [vmem:[#allocation2] sm:$0xff]
    %v105 = vld [vmem:[#allocation2 + $0x8] sm:$0xff]
    %106 = vadd.xlane.f32.xlu0 %v104
    %v107 = vpop.xlane.xlu0 %106
    %108 = vadd.xlane.f32.xlu0 %v105
    %v109 = vpop.xlane.xlu0 %108
    %v110 = vrcp.pop 128.0
    %v111 = vmul.f32 %v107, %v110
    %v112 = vmul.f32 %v109, %v110
    %v113 = vmul.f32 %v104, %v104
    %v114 = vmul.f32 %v105, %v105
    %115 = vadd.xlane.f32.xlu0 %v113
    %v116 = vpop.xlane.xlu0 %115
    %117 = vadd.xlane.f32.xlu0 %v114
    %v118 = vpop.xlane.xlu0 %117
    %v119 = vmul.f32 %v116, %v110
    %v120 = vmul.f32 %v118, %v110
    %v121 = vmul.f32 %v111, %v111
    %v122 = vmul.f32 %v112, %v112
    %v123 = vsub.f32 %v119, %v121
    %v124 = vsub.f32 %v120, %v122
    %v125 = vadd.f32 %v123, 1e-05
    %v126 = vadd.f32 %v124, 1e-05
    %v127 = vrsqrt.pop %v125
    %v128 = vrsqrt.pop %v126
    %v129 = vld [vmem:[%s2] sm:$0x1]
    %v130 = vld [vmem:[%s2 + $0x1] sm:$0x1]
    %v131 = vsub.f32 %v104, %v111
    %v132 = vsub.f32 %v105, %v112
    %v133 = vmul.f32 %v131, %v127
    %v134 = vmul.f32 %v132, %v128
    %v135 = vlaneseq
    %v136 = vshrl.u32 %v135, 7
    %v137 = vsub.s32 0, %v136
    %v138 = vrot.slane %v129, %v137
    %v139 = vmul.f32 %v133, %v138
    %v140 = vmul.f32 %v134, %v138
    %v141 = vlaneseq
    %v142 = vshrl.u32 %v141, 7
    %v143 = vsub.s32 0, %v142
    %v144 = vrot.slane %v130, %v143
    %v145 = vadd.f32 %v139, %v144
    %v146 = vadd.f32 %v140, %v144
    %147 = vst [vmem:[#allocation8] sm:$0xff] %v145
    %148 = vst [vmem:[#allocation8 + $0x8] sm:$0xff] %v146
    // Predicated region
    $region22: #{tpu_custom_call.1} parent=1 // pred_check
      _
    $region23: #{tpu_custom_call.1} parent=1 // pred_check_branch
      %150 = sbr.rel (0) target = $region25
    $region24: #{tpu_custom_call.1} parent=1 // pred_region
      %s152 = ssub.s32 256, 256
      %153 = vsyncadd [#allocation5], %s152
      %s154 = sshll.u32 [#allocation8], 4
      %s155 = int_to_ptr.vmem [resolvable:$true] %s154
      %160 = dma.vmem_to_hbm [thread:$0]  %s155, 256, %s3, [#allocation5], 128, 128, 8
    $region25: #{tpu_custom_call.1} parent=1 // pred_fallthru
      _
    // Predicated region
    $region26: #{tpu_custom_call.1} parent=1 // pred_check
      _
    $region27: #{tpu_custom_call.1} parent=1 // pred_check_branch
      %162 = sbr.rel (0) target = $region29
    $region28: #{tpu_custom_call.1} parent=1 // pred_region
      %163 = dma.done [#allocation5], 256
    $region29: #{tpu_custom_call.1} parent=1 // pred_fallthru
      _
    %164 = vsyncpa [#allocation4], 1
    %165 = vsyncpa [#allocation5], 1
    %166 = vsyncpa [#allocation6], 1

</llo_original>
